<compile_context>
chip_gen: v6e
topology: v6e:2x2x1
jax: 0.10.0
libtpu: 0.0.40
codegen_flags: <defaults>
</compile_context>

<pallas_src>
import jax
import jax.numpy as jnp
from jax import lax
from jax.experimental import pallas as pl
from jax.experimental.pallas import tpu as pltpu

_LANE = 128


# --------------------------------------------------------------------------- #
# Budgets / tiling helpers
# --------------------------------------------------------------------------- #
def _vmem_capacity_bytes() -> int:
    """Best-effort VMEM capacity query (falls back to v7x's 64 MiB per TC)."""
    try:
        info = pltpu.get_tpu_info()
        cap = int(getattr(info, "vmem_capacity_bytes", 0) or 0)
        if cap > 0:
            return cap
    except Exception:
        pass
    return 64 * 1024 * 1024


def _budgets(block_budget_override=None):
    """Generation-aware (per-buffer input block budget, vmem_limit_bytes)."""
    cap = _vmem_capacity_bytes()
    if cap >= 100 * 1024 * 1024:          # v5e / v6e: 128 MiB VMEM
        blk_budget = 20 * 1024 * 1024     # x2 (double buffer) ~= 40 MiB
        vmem_limit = 64 * 1024 * 1024
    else:                                 # v7x: 64 MiB per TensorCore
        blk_budget = 12 * 1024 * 1024     # x2 ~= 24 MiB, leaves headroom
        vmem_limit = 40 * 1024 * 1024
    if block_budget_override is not None:
        blk_budget = int(block_budget_override)
    return blk_budget, vmem_limit


def _round_down(x, m):
    return max(m, (x // m) * m)


def _round_up(x, m):
    return -(-x // m) * m


def _min_value(dtype):
    if jnp.issubdtype(dtype, jnp.floating):
        return float("-inf")
    return int(jnp.iinfo(dtype).min)


def _choose_tiling(B, C, HW, itemsize, blk_budget):
    """Pick (b_tile, c_tile, hw_tile) so one input block is ~blk_budget bytes."""
    # Channel tile: split C only if keeping it whole would force lanes < ~512.
    pref_lanes_pad = _round_up(min(HW, 512), _LANE)
    max_c = blk_budget // max(1, pref_lanes_pad * itemsize)
    if C <= max_c:
        c_tile = C
    else:
        c_tile = _round_down(max_c, 8)
        if c_tile >= C:
            c_tile = C
    n_c = pl.cdiv(C, c_tile)

    # Lane tile: as wide as fits with c_tile channels (multiple of 128 or full).
    max_lanes = blk_budget // max(1, c_tile * itemsize)
    if HW <= max_lanes:
        hw_tile = HW
    else:
        hw_tile = _round_down(max_lanes, _LANE)
        if hw_tile >= HW:
            hw_tile = HW
    n_hw = pl.cdiv(HW, hw_tile)

    # Batch packing: amortize per-step overhead when a single-batch block is small.
    blk_bytes_1b = max(1, c_tile * _round_up(hw_tile, _LANE) * itemsize)
    b_tile = max(1, min(B, blk_budget // blk_bytes_1b))
    n_b = pl.cdiv(B, b_tile)
    return b_tile, c_tile, hw_tile, n_b, n_hw, n_c


# --------------------------------------------------------------------------- #
# Kernels
# --------------------------------------------------------------------------- #
def _make_simple_kernel(inv_c):
    def kernel(x_ref, avg_ref, max_ref):
        x = x_ref[...]                                             # (Bt, C, T)
        s = jnp.sum(x, axis=1, dtype=jnp.float32, keepdims=True)   # f32 accum
        m = jnp.max(x, axis=1, keepdims=True)
        avg_ref[...] = (s * inv_c).astype(avg_ref.dtype)           # (Bt, 1, T)
        max_ref[...] = m.astype(max_ref.dtype)                     # (Bt, 1, T)

    return kernel


def _make_split_kernel(inv_c, c_total, c_tile, masked, x_dtype):
    """C split over grid axis 2 ("arbitrary"); f32 accumulators in VMEM scratch."""
    neg = _min_value(x_dtype)

    def kernel(x_ref, avg_ref, max_ref, sum_sc, max_sc):
        k = pl.program_id(2)

        @pl.when(k == 0)
        def _init():
            sum_sc[...] = jnp.zeros_like(sum_sc)
            max_sc[...] = jnp.full_like(max_sc, -jnp.inf)

        x = x_ref[...]                                             # (Bt, ct, T)
        if masked:
            # Ragged last C block: garbage rows must not reach the reduction.
            c_left = c_total - k * c_tile
            row = lax.broadcasted_iota(jnp.int32, x.shape, 1)
            valid = row < c_left
            x_sum = jnp.where(valid, x, jnp.zeros_like(x))
            x_max = jnp.where(valid, x, jnp.full_like(x, neg))
        else:
            x_sum = x_max = x

        sum_sc[...] = sum_sc[...] + jnp.sum(
            x_sum, axis=1, dtype=jnp.float32, keepdims=True)
        max_sc[...] = jnp.maximum(
            max_sc[...],
            jnp.max(x_max, axis=1, keepdims=True).astype(jnp.float32))

        @pl.when(k == pl.num_programs(2) - 1)
        def _finalize():
            avg_ref[...] = (sum_sc[...] * inv_c).astype(avg_ref.dtype)
            max_ref[...] = max_sc[...].astype(max_ref.dtype)

    return kernel


def _make_fused_kernel(inv_c, w):
    """Writes avg | max straight into a single (Bt, Ht, 2W) output block."""
    def kernel(x_ref, out_ref):
        x = x_ref[...]                                             # (Bt, C, Ht, W)
        s = jnp.sum(x, axis=1, dtype=jnp.float32) * inv_c          # (Bt, Ht, W)
        m = jnp.max(x, axis=1)                                     # (Bt, Ht, W)
        out_ref[:, :, :w] = s.astype(out_ref.dtype)
        out_ref[:, :, w:] = m.astype(out_ref.dtype)

    return kernel


# --------------------------------------------------------------------------- #
# pallas_call wrappers
# --------------------------------------------------------------------------- #
def _pooling_general(x, inv_c, blk_budget, vmem_limit):
    B, C, H, W = x.shape
    HW = H * W
    itemsize = jnp.dtype(x.dtype).itemsize
    b_tile, c_tile, hw_tile, n_b, n_hw, n_c = _choose_tiling(
        B, C, HW, itemsize, blk_budget)

    x2 = x.reshape(B, C, HW)                       # lane-dense layout
    cost = pl.CostEstimate(
        flops=2 * B * C * HW,
        transcendentals=0,
        bytes_accessed=(B * C * HW + 2 * B * HW) * itemsize)

    if n_c == 1:
        kernel = _make_simple_kernel(inv_c)
        grid = (n_b, n_hw)
        in_specs = [pl.BlockSpec((b_tile, c_tile, hw_tile),
                                 lambda b, t: (b, 0, t))]
        out_specs = [pl.BlockSpec((b_tile, 1, hw_tile), lambda b, t: (b, 0, t)),
                     pl.BlockSpec((b_tile, 1, hw_tile), lambda b, t: (b, 0, t))]
        scratch = []
        dims = ("parallel", "parallel")
    else:
        masked = (C % c_tile) != 0
        kernel = _make_split_kernel(inv_c, C, c_tile, masked, x.dtype)
        grid = (n_b, n_hw, n_c)                    # reduction axis last
        in_specs = [pl.BlockSpec((b_tile, c_tile, hw_tile),
                                 lambda b, t, k: (b, k, t))]
        out_specs = [pl.BlockSpec((b_tile, 1, hw_tile), lambda b, t, k: (b, 0, t)),
                     pl.BlockSpec((b_tile, 1, hw_tile), lambda b, t, k: (b, 0, t))]
        scratch = [pltpu.VMEM((b_tile, 1, hw_tile), jnp.float32),
                   pltpu.VMEM((b_tile, 1, hw_tile), jnp.float32)]
        dims = ("parallel", "parallel", "arbitrary")

    avg_out, max_out = pl.pallas_call(
        kernel,
        out_shape=(jax.ShapeDtypeStruct((B, 1, HW), x.dtype),
                   jax.ShapeDtypeStruct((B, 1, HW), x.dtype)),
        grid_spec=pltpu.PrefetchScalarGridSpec(
            num_scalar_prefetch=0, grid=grid,
            in_specs=in_specs, out_specs=out_specs, scratch_shapes=scratch),
        compiler_params=pltpu.CompilerParams(
            dimension_semantics=dims, vmem_limit_bytes=vmem_limit),
        cost_estimate=cost,
    )(x2)

    # TODO(synk): this concat re-reads/re-writes both halves (extra HBM traffic
    # for small C); it is avoided by the fused path whenever W % 128 == 0.
    v_avg = avg_out.reshape(B, H, W)
    v_max = max_out.reshape(B, H, W)
    return jnp.concatenate((v_avg, v_max), axis=-1)


def _pooling_fused(x, inv_c, blk_budget, vmem_limit):
    B, C, H, W = x.shape
    itemsize = jnp.dtype(x.dtype).itemsize
    row_bytes = C * W * itemsize

    if C * H * W * itemsize <= blk_budget:
        h_tile = H                                  # whole image per block
    else:
        h_tile = _round_down(blk_budget // row_bytes, 8)   # >= 8 by caller guard
    n_h = pl.cdiv(H, h_tile)

    blk_bytes_1b = max(1, C * h_tile * W * itemsize)
    b_tile = max(1, min(B, blk_budget // blk_bytes_1b))    # batch packing
    n_b = pl.cdiv(B, b_tile)

    cost = pl.CostEstimate(
        flops=2 * B * C * H * W,
        transcendentals=0,
        bytes_accessed=(B * C * H * W + 2 * B * H * W) * itemsize)

    return pl.pallas_call(
        _make_fused_kernel(inv_c, W),
        out_shape=jax.ShapeDtypeStruct((B, H, 2 * W), x.dtype),
        grid_spec=pltpu.PrefetchScalarGridSpec(
            num_scalar_prefetch=0, grid=(n_b, n_h),
            in_specs=[pl.BlockSpec((b_tile, C, h_tile, W),
                                   lambda b, h: (b, 0, h, 0))],
            out_specs=pl.BlockSpec((b_tile, h_tile, 2 * W),
                                   lambda b, h: (b, h, 0))),
        compiler_params=pltpu.CompilerParams(
            dimension_semantics=("parallel", "parallel"),
            vmem_limit_bytes=vmem_limit),
        cost_estimate=cost,
    )(x)


def pooling_layer(x, *, _block_budget_bytes=None):
    """Pallas TPU implementation of Pooling_Layer.forward for NCHW input."""
    # TODO(synk): integer inputs would need a float output to match PyTorch's
    # `x.sum(1) / C` promotion; this kernel keeps the input dtype.
    B, C, H, W = x.shape
    itemsize = jnp.dtype(x.dtype).itemsize
    inv_c = float(1.0 / C)
    blk_budget, vmem_limit = _budgets(_block_budget_bytes)

    # Fused-concat path: lane-dense direct write into (B, H, 2W) when the W
    # axis stays 128-aligned and the whole channel dim fits in one block.
    if W % _LANE == 0 and C * min(H, 8) * W * itemsize <= blk_budget:
        return _pooling_fused(x, inv_c, blk_budget, vmem_limit)
    return _pooling_general(x, inv_c, blk_budget, vmem_limit)


# --------------------------------------------------------------------------- #
# Self-test
# --------------------------------------------------------------------------- #
if __name__ == "__main__":
    def ref(x):
        return jnp.concatenate(
            (jnp.sum(x, axis=1) / x.shape[1], jnp.max(x, axis=1)), axis=-1)

    k1, k2, k3 = jax.random.split(jax.random.PRNGKey(0), 3)

    # 1) Spec shape -> general path (lane-dense flattened HW, single C block).
    x1 = jax.random.normal(k1, (2, 4, 16, 16), dtype=jnp.float32)
    o1 = pooling_layer(x1)
    jax.block_until_ready(o1)
    assert o1.shape == (2, 16, 32), o1.shape
    assert jnp.allclose(o1, ref(x1), atol=1e-5, rtol=1e-5)

    # 2) W % 128 == 0 -> fused path (no wrapper concat).
    x2 = jax.random.normal(k2, (2, 4, 8, 128), dtype=jnp.float32)
    o2 = pooling_layer(x2)
    jax.block_until_ready(o2)
    assert o2.shape == (2, 8, 256), o2.shape
    assert jnp.allclose(o2, ref(x2), atol=1e-5, rtol=1e-5)

    # 3) Forced tiny block budget -> C split over "arbitrary" axis w/ masking.
    x3 = jax.random.normal(k3, (2, 20, 8, 32), dtype=jnp.float32)
    o3 = pooling_layer(x3, _block_budget_bytes=8 * 1024)
    jax.block_until_ready(o3)
    assert o3.shape == (2, 8, 64), o3.shape
    assert jnp.allclose(o3, ref(x3), atol=1e-5, rtol=1e-5)

    print("KERNEL_OK")
</pallas_src>

<mosaic_0001>
module attributes {stable_mosaic.version = 11 : i64} {
  func.func @kernel(%arg0: i32, %arg1: i32, %arg2: memref<2x4x256xf32, #tpu.memory_space<vmem>>, %arg3: memref<2x1x256xf32, #tpu.memory_space<vmem>>, %arg4: memref<2x1x256xf32, #tpu.memory_space<vmem>>) attributes {dimension_semantics = [#tpu.dimension_semantics<parallel>, #tpu.dimension_semantics<parallel>], iteration_bounds = array<i64: 1, 1>, scalar_prefetch = 0 : i64, scratch_operands = 0 : i64, tpu.core_type = #tpu.core_type<tc>, window_params = [{transform_indices = @transform_0, window_bounds = array<i64: 2, 4, 256>}, {transform_indices = @transform_1, window_bounds = array<i64: 2, 1, 256>}, {transform_indices = @transform_2, window_bounds = array<i64: 2, 1, 256>}]} {
    %c0 = arith.constant 0 : index
    %c0_0 = arith.constant 0 : index
    %c0_1 = arith.constant 0 : index
    %0 = vector.load %arg2[%c0, %c0_0, %c0_1] : memref<2x4x256xf32, #tpu.memory_space<vmem>>, vector<2x4x256xf32>
    %cst = arith.constant dense<0.000000e+00> : vector<2x256xf32>
    %1 = vector.multi_reduction <add>, %0, %cst [1] : vector<2x4x256xf32> to vector<2x256xf32>
    %2 = vector.shape_cast %1 : vector<2x256xf32> to vector<2x1x256xf32>
    %cst_2 = arith.constant dense<0xFF800000> : vector<2x256xf32>
    %3 = vector.multi_reduction <maximumf>, %0, %cst_2 [1] : vector<2x4x256xf32> to vector<2x256xf32>
    %4 = vector.shape_cast %3 : vector<2x256xf32> to vector<2x1x256xf32>
    %cst_3 = arith.constant 2.500000e-01 : f32
    %5 = vector.broadcast %cst_3 : f32 to vector<2x1x256xf32>
    %6 = arith.mulf %2, %5 : vector<2x1x256xf32>
    %c0_4 = arith.constant 0 : index
    %c0_5 = arith.constant 0 : index
    %c0_6 = arith.constant 0 : index
    %7 = vector.load %arg3[%c0_4, %c0_5, %c0_6] : memref<2x1x256xf32, #tpu.memory_space<vmem>>, vector<2x1x256xf32>
    tpu.vector_store %arg3[%c0_4, %c0_5, %c0_6], %6 {strides = array<i32>} : memref<2x1x256xf32, #tpu.memory_space<vmem>>, vector<2x1x256xf32>,
    %c0_7 = arith.constant 0 : index
    %c0_8 = arith.constant 0 : index
    %c0_9 = arith.constant 0 : index
    %8 = vector.load %arg4[%c0_7, %c0_8, %c0_9] : memref<2x1x256xf32, #tpu.memory_space<vmem>>, vector<2x1x256xf32>
    tpu.vector_store %arg4[%c0_7, %c0_8, %c0_9], %4 {strides = array<i32>} : memref<2x1x256xf32, #tpu.memory_space<vmem>>, vector<2x1x256xf32>,
    return
  }
  func.func @transform_0(%arg0: i32, %arg1: i32) -> (i32, i32, i32) {
    %c0_i32 = arith.constant 0 : i32
    %c0_i32_0 = arith.constant 0 : i32
    return %arg0, %c0_i32, %arg1 : i32, i32, i32
  }
  func.func @transform_1(%arg0: i32, %arg1: i32) -> (i32, i32, i32) {
    %c0_i32 = arith.constant 0 : i32
    %c0_i32_0 = arith.constant 0 : i32
    return %arg0, %c0_i32, %arg1 : i32, i32, i32
  }
  func.func @transform_2(%arg0: i32, %arg1: i32) -> (i32, i32, i32) {
    %c0_i32 = arith.constant 0 : i32
    %c0_i32_0 = arith.constant 0 : i32
    return %arg0, %c0_i32, %arg1 : i32, i32, i32
  }
}

</mosaic_0001>

<llo_original>
// kernel: tpu_custom_call.1
$region0: #{tpu_custom_call.1}
  #allocation0 [shape = 'u32[]', space=smem, size = 0x4, offset = 0x4, fixed_abs, tag = 'smem constant byte address 0x4 - core index']
  #allocation1 [shape = 'u32[144,128]{1,0:T(1,128)}', space=vmem, size = 0x12000, scoped, tag = 'internal scratch']
  %s0 = inlined_call_operand.hbm [shape: f32[2,4,256], index: 0, kind: input, shape index: {}]
  %s1 = inlined_call_operand.hbm [shape: f32[2,1,256], index: 1, kind: output, shape index: {0}]
  %s2 = inlined_call_operand.hbm [shape: f32[2,1,256], index: 2, kind: output, shape index: {1}]
  %3 = xla_tuple %s1, %s2
  %s4 = sld [smem:[#allocation0]]
  $region26: #{tpu_custom_call.1} parent=0
    _
  %s6 = ssub.s32 1, %s4
  %s7 = scalar_select 0, %s6, %s4
  $region1: #{tpu_custom_call.1} parent=0
    #allocation2 [shape = 'u8[8192]{0}', space=vmem, size = 0x2000, scoped, tag = 'input window, operand 0, single buffered']
    #allocation3 [shape = 's32[1]{0}', space=sflag, size = 0x4, scoped, tag = 'scoped memory for tpu_custom_call.1']
    #allocation4 [shape = 's32[1]{0}', space=sflag, size = 0x4, scoped, tag = 'scoped memory for tpu_custom_call.1']
    #allocation5 [shape = 'u8[2048]{0}', space=vmem, size = 0x800, scoped, tag = 'output window, operand 0, single buffered']
    #allocation6 [shape = 'u8[2048]{0}', space=vmem, size = 0x800, scoped, tag = 'output window, operand 1, single buffered']
    #allocation7 [shape = 's32[1]{0}', space=sflag, size = 0x4, scoped, tag = 'scoped memory for tpu_custom_call.1']
    %8 = vsyncpa [#allocation3], 0
    %9 = vsyncpa [#allocation4], 0
    %10 = vsyncpa [#allocation7], 0
    // Predicated region
    $region2: #{tpu_custom_call.1} parent=1 // pred_check
      _
    $region3: #{tpu_custom_call.1} parent=1 // pred_check_branch
      %12 = sbr.rel (0) target = $region5
    $region4: #{tpu_custom_call.1} parent=1 // pred_region
      %s14 = ssub.s32 256, 256
      %15 = vsyncadd [#allocation3], %s14
      %s16 = sshll.u32 [#allocation2], 4
      %s17 = int_to_ptr.vmem [resolvable:$true] %s16
      %22 = dma.hbm_to_vmem [thread:$0]  %s0, 256, %s17, [#allocation3], 128, 128, 8
    $region5: #{tpu_custom_call.1} parent=1 // pred_fallthru
      _
    // Predicated region
    $region6: #{tpu_custom_call.1} parent=1 // pred_check
      _
    $region7: #{tpu_custom_call.1} parent=1 // pred_check_branch
      %24 = sbr.rel (0) target = $region9
    $region8: #{tpu_custom_call.1} parent=1 // pred_region
      %25 = dma.done [#allocation3], 256
    $region9: #{tpu_custom_call.1} parent=1 // pred_fallthru
      _
    %v26 = vld [vmem:[#allocation2] sm:$0xff]
    %v27 = vld [vmem:[#allocation2 + $0x8] sm:$0xff]
    %v30 = vcombine.high %v26, %v26
    %v31 = vcombine.high %v27, %v27
    %vm34 = vcmask 1043456
    %v35 = vsel %vm34, %v26, 0.0
    %v36 = vrot.slane %v35, 4
    %v37 = vadd.f32 %v35, %v36
    %v38 = vrot.slane %v37, 2
    %v39 = vadd.f32 %v37, %v38
    %v40 = vrot.slane %v39, 1
    %v41 = vadd.f32 %v39, %v40
    %v42 = vsel %vm34, %v30, 0.0
    %v43 = vrot.slane %v42, 4
    %v44 = vadd.f32 %v42, %v43
    %v45 = vrot.slane %v44, 2
    %v46 = vadd.f32 %v44, %v45
    %v47 = vrot.slane %v46, 1
    %v48 = vadd.f32 %v46, %v47
    %v49 = vsel %vm34, %v27, 0.0
    %v50 = vrot.slane %v49, 4
    %v51 = vadd.f32 %v49, %v50
    %v52 = vrot.slane %v51, 2
    %v53 = vadd.f32 %v51, %v52
    %v54 = vrot.slane %v53, 1
    %v55 = vadd.f32 %v53, %v54
    %v56 = vsel %vm34, %v31, 0.0
    %v57 = vrot.slane %v56, 4
    %v58 = vadd.f32 %v56, %v57
    %v59 = vrot.slane %v58, 2
    %v60 = vadd.f32 %v58, %v59
    %v61 = vrot.slane %v60, 1
    %v62 = vadd.f32 %v60, %v61
    %v63 = vsel %vm34, %v26, -inf
    %v64 = vrot.slane %v63, 4
    %v65 = vmax.f32 %v63, %v64
    %v66 = vrot.slane %v65, 2
    %v67 = vmax.f32 %v65, %v66
    %v68 = vrot.slane %v67, 1
    %v69 = vmax.f32 %v67, %v68
    %v70 = vsel %vm34, %v30, -inf
    %v71 = vrot.slane %v70, 4
    %v72 = vmax.f32 %v70, %v71
    %v73 = vrot.slane %v72, 2
    %v74 = vmax.f32 %v72, %v73
    %v75 = vrot.slane %v74, 1
    %v76 = vmax.f32 %v74, %v75
    %v77 = vsel %vm34, %v27, -inf
    %v78 = vrot.slane %v77, 4
    %v79 = vmax.f32 %v77, %v78
    %v80 = vrot.slane %v79, 2
    %v81 = vmax.f32 %v79, %v80
    %v82 = vrot.slane %v81, 1
    %v83 = vmax.f32 %v81, %v82
    %v84 = vsel %vm34, %v31, -inf
    %v85 = vrot.slane %v84, 4
    %v86 = vmax.f32 %v84, %v85
    %v87 = vrot.slane %v86, 2
    %v88 = vmax.f32 %v86, %v87
    %v89 = vrot.slane %v88, 1
    %v90 = vmax.f32 %v88, %v89
    %v91 = vmul.f32 %v41, 0.25
    %v92 = vmul.f32 %v48, 0.25
    %v93 = vmul.f32 %v55, 0.25
    %v94 = vmul.f32 %v62, 0.25
    %v99 = vcombine.low %v91, %v92
    %v101 = vunpack.c.l.s4 1966171168
    %v102 = vunpack.c.0.s8 %v101
    %v103 = vlaneseq
    %v104 = vshrl.u32 %v103, 7
    %v105 = vsub.s32 %v102, %v104
    %v106 = vrot.slane %v99, %v105
    %v108 = vunpack.c.l.s4 1966171168
    %v109 = vunpack.c.0.s8 %v108
    %v110 = vlaneseq
    %v111 = vshrl.u32 %v110, 7
    %v112 = vsub.s32 %v109, %v111
    %v113 = vrot.slane %v106, %v112
    %v114 = vcombine.low %v93, %v94
    %v116 = vunpack.c.l.s4 1966171168
    %v117 = vunpack.c.0.s8 %v116
    %v118 = vlaneseq
    %v119 = vshrl.u32 %v118, 7
    %v120 = vsub.s32 %v117, %v119
    %v121 = vrot.slane %v114, %v120
    %v123 = vunpack.c.l.s4 1966171168
    %v124 = vunpack.c.0.s8 %v123
    %v125 = vlaneseq
    %v126 = vshrl.u32 %v125, 7
    %v127 = vsub.s32 %v124, %v126
    %v128 = vrot.slane %v121, %v127
    %v131 = vlaneseq
    %vm132 = vcmp.ge.s32.totalorder %v131, 0
    %vm133 = vcmp.lt.s32.totalorder %v131, 256
    %vm134 = vmand %vm132, %vm133
    %135 = vst.msk [vmem:[#allocation5] sm:$0x3] %vm134, %v113
    %136 = vst.msk [vmem:[#allocation5 + $0x2] sm:$0x3] %vm134, %v128
    %v141 = vcombine.low %v69, %v76
    %v143 = vunpack.c.l.s4 1966171168
    %v144 = vunpack.c.0.s8 %v143
    %v145 = vlaneseq
    %v146 = vshrl.u32 %v145, 7
    %v147 = vsub.s32 %v144, %v146
    %v148 = vrot.slane %v141, %v147
    %v150 = vunpack.c.l.s4 1966171168
    %v151 = vunpack.c.0.s8 %v150
    %v152 = vlaneseq
    %v153 = vshrl.u32 %v152, 7
    %v154 = vsub.s32 %v151, %v153
    %v155 = vrot.slane %v148, %v154
    %v156 = vcombine.low %v83, %v90
    %v158 = vunpack.c.l.s4 1966171168
    %v159 = vunpack.c.0.s8 %v158
    %v160 = vlaneseq
    %v161 = vshrl.u32 %v160, 7
    %v162 = vsub.s32 %v159, %v161
    %v163 = vrot.slane %v156, %v162
    %v165 = vunpack.c.l.s4 1966171168
    %v166 = vunpack.c.0.s8 %v165
    %v167 = vlaneseq
    %v168 = vshrl.u32 %v167, 7
    %v169 = vsub.s32 %v166, %v168
    %v170 = vrot.slane %v163, %v169
    %173 = vst.msk [vmem:[#allocation6] sm:$0x3] %vm134, %v155
    %174 = vst.msk [vmem:[#allocation6 + $0x2] sm:$0x3] %vm134, %v170
    // Predicated region
    $region10: #{tpu_custom_call.1} parent=1 // pred_check
      _
    $region11: #{tpu_custom_call.1} parent=1 // pred_check_branch
      %176 = sbr.rel (0) target = $region13
    $region12: #{tpu_custom_call.1} parent=1 // pred_region
      %s178 = ssub.s32 64, 64
      %179 = vsyncadd [#allocation4], %s178
      %s180 = sshll.u32 [#allocation5], 4
      %s181 = int_to_ptr.vmem [resolvable:$true] %s180
      %186 = dma.vmem_to_hbm [thread:$0]  %s181, 64, %s1, [#allocation4], 32, 32, 2
    $region13: #{tpu_custom_call.1} parent=1 // pred_fallthru
      _
    // Predicated region
    $region14: #{tpu_custom_call.1} parent=1 // pred_check
      _
    $region15: #{tpu_custom_call.1} parent=1 // pred_check_branch
      %188 = sbr.rel (0) target = $region17
    $region16: #{tpu_custom_call.1} parent=1 // pred_region
      %s190 = ssub.s32 64, 64
      %191 = vsyncadd [#allocation7], %s190
      %s192 = sshll.u32 [#allocation6], 4
      %s193 = int_to_ptr.vmem [resolvable:$true] %s192
      %198 = dma.vmem_to_hbm [thread:$0]  %s193, 64, %s2, [#allocation7], 32, 32, 2
    $region17: #{tpu_custom_call.1} parent=1 // pred_fallthru
      _
    // Predicated region
    $region18: #{tpu_custom_call.1} parent=1 // pred_check
      _
    $region19: #{tpu_custom_call.1} parent=1 // pred_check_branch
      %200 = sbr.rel (0) target = $region21
    $region20: #{tpu_custom_call.1} parent=1 // pred_region
      %201 = dma.done [#allocation4], 64
    $region21: #{tpu_custom_call.1} parent=1 // pred_fallthru
      _
    // Predicated region
    $region22: #{tpu_custom_call.1} parent=1 // pred_check
      _
    $region23: #{tpu_custom_call.1} parent=1 // pred_check_branch
      %203 = sbr.rel (0) target = $region25
    $region24: #{tpu_custom_call.1} parent=1 // pred_region
      %204 = dma.done [#allocation7], 64
    $region25: #{tpu_custom_call.1} parent=1 // pred_fallthru
      _
    %205 = vsyncpa [#allocation3], 1
    %206 = vsyncpa [#allocation4], 1
    %207 = vsyncpa [#allocation7], 1

</llo_original>
